<compile_context>
chip_gen: v7x
topology: tpu7x:2x2x1
jax: 0.10.0
libtpu: 0.0.40
codegen_flags: <defaults>
</compile_context>

<pallas_src>
import math

import jax
import jax.numpy as jnp
from jax.experimental import pallas as pl
from jax.experimental.pallas import tpu as pltpu


def _round_up(x, m):
    return ((x + m - 1) // m) * m


def _backbone_update_kernel(s_ref, wt_ref, b_ref, o_ref):
    # s_ref: (TM, C_s)   wt_ref: (C_s, 6)   b_ref: (1, 6) f32   o_ref: (TM, 6)
    # Homogeneous operands go straight to the MXU; accumulation in f32.
    y = jnp.dot(s_ref[...], wt_ref[...], preferred_element_type=jnp.float32)
    # Bias add on the f32 accumulator (cheap even on v5e's f32-only VPU).
    o_ref[...] = (y + b_ref[...]).astype(o_ref.dtype)


# ---- tuning constants -------------------------------------------------------
_TM_CEIL = 4096            # hard row-tile ceiling (review: 2048-4096 for c_s~384)
_VMEM_BUDGET = 24 << 20    # total kernel VMEM footprint target; safe on v5e/v6e/v7x
_N_IN_BUFS = 3             # streamed s tile is triple-buffered (pl.Buffered(3))
_N_OUT_BUFS = 2            # output keeps default double buffering
_LANE = 128
_SUBLANE_PACK = 16         # round tm to 16 so bf16 (16,128) sublane packing aligns


def backbone_update(s, weight, bias, *, tm=None):
    """Pallas implementation of BackboneUpdate.forward.

    Args:
        s:      [*, N_res, C_s] single representation
        weight: [6, C_s]  (nn.Linear weight layout)
        bias:   [6]
    Returns:
        [*, N_res, 6] update vector
    """
    orig_shape = s.shape
    c_s = orig_shape[-1]
    m = math.prod(orig_shape[:-1]) if len(orig_shape) > 1 else 1
    s2d = s.reshape(m, c_s)

    # Dtype hygiene: homogeneous matmul operands (bf16xbf16 or f32xf32) for the
    # MXU; bias stays f32 so the add happens on the f32 accumulator.
    wt = weight.T.astype(s.dtype)                       # (c_s, 6), resident
    bias2d = bias.astype(jnp.float32).reshape(1, 6)

    itemsize = jnp.dtype(s.dtype).itemsize
    out_itemsize = itemsize
    w_itemsize = jnp.dtype(wt.dtype).itemsize

    # ---- VMEM accounting (lane-padded, all buffers) -------------------------
    # TODO(synk): for production c_s < 128, pack k=128//c_s rows per lane-row
    # (block-diagonal weight) to avoid the 128/c_s x lane-padding waste.
    c_s_pad = _round_up(c_s, _LANE)
    per_row = (_N_IN_BUFS * c_s_pad * itemsize            # streamed s tile(s)
               + _N_OUT_BUFS * _LANE * out_itemsize)      # (tm,6) padded to (tm,128)
    resident = (2 * c_s_pad * _LANE * w_itemsize          # W^T (lane-padded)
                + 2 * 8 * _LANE * 4)                      # bias

    if tm is None:
        tm_cap = (_VMEM_BUDGET - resident) // per_row
        tm_cap = max(_SUBLANE_PACK, (tm_cap // _SUBLANE_PACK) * _SUBLANE_PACK)
        # Start from half of M so medium inputs always give >=2 grid steps
        # (both v7x TCs get work), capped by VMEM budget and the hard ceiling.
        half_rounded = _round_up(-(-m // 2), _SUBLANE_PACK)
        tm = max(_SUBLANE_PACK, min(_TM_CEIL, tm_cap, half_rounded))

        # Re-balance: keep the grid even so megacore sharding splits evenly.
        grid = pl.cdiv(m, tm)
        if grid > 1 and grid % 2 == 1:
            grid_even = grid + 1
            tm = max(_SUBLANE_PACK,
                     min(tm, _round_up(-(-m // grid_even), _SUBLANE_PACK)))

    grid = pl.cdiv(m, tm)
    footprint = tm * per_row + resident
    vmem_limit = int(min(100 << 20, max(32 << 20, footprint + (4 << 20))))

    # Deep input buffering only pays off when there are enough grid steps.
    in_pipeline_mode = pl.Buffered(_N_IN_BUFS) if grid >= _N_IN_BUFS else None

    cost = pl.CostEstimate(
        flops=2 * m * c_s * 6,
        transcendentals=0,
        bytes_accessed=(
            m * c_s * itemsize                               # stream s
            + c_s * 6 * w_itemsize                           # resident weight
            + m * 6 * out_itemsize                           # write update
        ),
    )

    out = pl.pallas_call(
        _backbone_update_kernel,
        out_shape=jax.ShapeDtypeStruct((m, 6), s.dtype),
        grid_spec=pltpu.PrefetchScalarGridSpec(
            num_scalar_prefetch=0,
            grid=(grid,),
            in_specs=[
                pl.BlockSpec((tm, c_s), lambda i: (i, 0),
                             pipeline_mode=in_pipeline_mode),  # streamed rows of s
                pl.BlockSpec((c_s, 6), lambda i: (0, 0)),      # W^T, block-invariant
                pl.BlockSpec((1, 6), lambda i: (0, 0)),        # bias, block-invariant
            ],
            out_specs=pl.BlockSpec((tm, 6), lambda i: (i, 0)),
        ),
        compiler_params=pltpu.CompilerParams(
            dimension_semantics=("parallel",),
            vmem_limit_bytes=vmem_limit,
        ),
        cost_estimate=cost,
    )(s2d, wt, bias2d)

    return out.reshape(*orig_shape[:-1], 6)


if __name__ == "__main__":
    key = jax.random.PRNGKey(0)
    k_s, k_w, k_b = jax.random.split(key, 3)

    batch, n_res, c_s = 2, 8, 32

    s = jax.random.normal(k_s, (batch, n_res, c_s), dtype=jnp.float32)

    # Deterministic parameter init (shapes from Linear(c_s, 6)).
    # NOTE: init='final' in openfold zeroes these; random values used here so
    # the kernel's compute path is non-trivially verified.
    weight = 0.02 * jax.random.normal(k_w, (6, c_s), dtype=jnp.float32)
    bias = 0.02 * jax.random.normal(k_b, (6,), dtype=jnp.float32)

    update = backbone_update(s, weight, bias)
    update = jax.block_until_ready(update)

    # Reference check against plain JAX (same semantics as nn.Linear).
    ref = jnp.einsum("bnc,oc->bno", s, weight) + bias
    assert update.shape == (batch, n_res, 6)
    assert jnp.allclose(update, ref, atol=1e-5, rtol=1e-5)

    print("KERNEL_OK")
</pallas_src>

<mosaic_0001>
module attributes {stable_mosaic.version = 11 : i64} {
  func.func @_backbone_update_kernel(%arg0: i32, %arg1: memref<16x32xf32, #tpu.memory_space<vmem>>, %arg2: memref<32x6xf32, #tpu.memory_space<vmem>>, %arg3: memref<1x6xf32, #tpu.memory_space<vmem>>, %arg4: memref<16x6xf32, #tpu.memory_space<vmem>>) attributes {dimension_semantics = [#tpu.dimension_semantics<parallel>], iteration_bounds = array<i64: 1>, scalar_prefetch = 0 : i64, scratch_operands = 0 : i64, tpu.core_type = #tpu.core_type<tc>, window_params = [{transform_indices = @transform_0, window_bounds = array<i64: 16, 32>}, {pipeline_mode = #tpu.pipeline_mode<synchronous>, transform_indices = @transform_1, window_bounds = array<i64: 32, 6>}, {pipeline_mode = #tpu.pipeline_mode<synchronous>, transform_indices = @transform_2, window_bounds = array<i64: 1, 6>}, {transform_indices = @transform_3, window_bounds = array<i64: 16, 6>}]} {
    %c0 = arith.constant 0 : index
    %c0_0 = arith.constant 0 : index
    %0 = vector.load %arg1[%c0, %c0_0] : memref<16x32xf32, #tpu.memory_space<vmem>>, vector<16x32xf32>
    %c0_1 = arith.constant 0 : index
    %c0_2 = arith.constant 0 : index
    %1 = vector.load %arg2[%c0_1, %c0_2] : memref<32x6xf32, #tpu.memory_space<vmem>>, vector<32x6xf32>
    %cst = arith.constant dense<0.000000e+00> : vector<16x6xf32>
    %2 = tpu.matmul %0, %1, %cst {dimension_numbers = #tpu.dot_dimension_numbers<[1], [0], [0], [1], [0, 0, 1, 1], [], []>} : vector<16x32xf32>, vector<32x6xf32>, vector<16x6xf32> -> vector<16x6xf32>
    %c0_3 = arith.constant 0 : index
    %c0_4 = arith.constant 0 : index
    %3 = vector.load %arg3[%c0_3, %c0_4] : memref<1x6xf32, #tpu.memory_space<vmem>>, vector<1x6xf32>
    %4 = vector.broadcast %3 : vector<1x6xf32> to vector<16x6xf32>
    %5 = arith.addf %2, %4 : vector<16x6xf32>
    %c0_5 = arith.constant 0 : index
    %c0_6 = arith.constant 0 : index
    %6 = vector.load %arg4[%c0_5, %c0_6] : memref<16x6xf32, #tpu.memory_space<vmem>>, vector<16x6xf32>
    tpu.vector_store %arg4[%c0_5, %c0_6], %5 {strides = array<i32>} : memref<16x6xf32, #tpu.memory_space<vmem>>, vector<16x6xf32>,
    return
  }
  func.func @transform_0(%arg0: i32) -> (i32, i32) {
    %c0_i32 = arith.constant 0 : i32
    %c0_i32_0 = arith.constant 0 : i32
    return %arg0, %c0_i32 : i32, i32
  }
  func.func @transform_1(%arg0: i32) -> (i32, i32) {
    %c0_i32 = arith.constant 0 : i32
    %c0_i32_0 = arith.constant 0 : i32
    %c0_i32_1 = arith.constant 0 : i32
    return %c0_i32, %c0_i32_0 : i32, i32
  }
  func.func @transform_2(%arg0: i32) -> (i32, i32) {
    %c0_i32 = arith.constant 0 : i32
    %c0_i32_0 = arith.constant 0 : i32
    %c0_i32_1 = arith.constant 0 : i32
    return %c0_i32, %c0_i32_0 : i32, i32
  }
  func.func @transform_3(%arg0: i32) -> (i32, i32) {
    %c0_i32 = arith.constant 0 : i32
    %c0_i32_0 = arith.constant 0 : i32
    return %arg0, %c0_i32 : i32, i32
  }
}

</mosaic_0001>

<llo_original>
// kernel: tpu_custom_call.1
$region0: #{tpu_custom_call.1}
  #allocation0 [shape = 'u32[]', space=smem, size = 0x4, offset = 0x4, fixed_abs, tag = 'smem constant byte address 0x4 - core index']
  #allocation1 [shape = 'u32[144,128]{1,0:T(1,128)}', space=vmem, size = 0x12000, scoped, tag = 'internal scratch']
  %s0 = inlined_call_operand.vmem [shape: f32[16,32], index: 0, kind: input, shape index: {}]
  %s1 = inlined_call_operand.vmem [shape: f32[32,6], index: 1, kind: input, shape index: {}]
  %s2 = inlined_call_operand.vmem [shape: f32[1,6], index: 2, kind: input, shape index: {}]
  %s3 = inlined_call_operand.vmem [shape: f32[16,6], index: 3, kind: output, shape index: {}]
  %s4 = sld [smem:[#allocation0]]
  $region22: #{tpu_custom_call.1} parent=0
    _
  %s6 = ssub.s32 1, %s4
  %s7 = scalar_select 0, %s6, %s4
  // Predicated region
  $region2: #{tpu_custom_call.1} parent=0 // pred_check
    _
  $region3: #{tpu_custom_call.1} parent=0 // pred_check_branch
    %9 = sbr.rel (0) target = $region5
  $region4: #{tpu_custom_call.1} parent=0 // pred_region
    _
  $region5: #{tpu_custom_call.1} parent=0 // pred_fallthru
    _
  // Predicated region
  $region6: #{tpu_custom_call.1} parent=0 // pred_check
    _
  $region7: #{tpu_custom_call.1} parent=0 // pred_check_branch
    %11 = sbr.rel (0) target = $region9
  $region8: #{tpu_custom_call.1} parent=0 // pred_region
    _
  $region9: #{tpu_custom_call.1} parent=0 // pred_fallthru
    _
  // Predicated region
  $region10: #{tpu_custom_call.1} parent=0 // pred_check
    _
  $region11: #{tpu_custom_call.1} parent=0 // pred_check_branch
    %13 = sbr.rel (0) target = $region13
  $region12: #{tpu_custom_call.1} parent=0 // pred_region
    _
  $region13: #{tpu_custom_call.1} parent=0 // pred_fallthru
    _
  %v14 = vld [vmem:[%s0] sm:$0xff]
  %v15 = vld [vmem:[%s0 + $0x8] sm:$0xff]
  %v16 = vld [vmem:[%s1] sm:$0xff]
  %v17 = vld [vmem:[%s1 + $0x8] sm:$0xff]
  %v18 = vld [vmem:[%s1 + $0x10] sm:$0xff]
  %v19 = vld [vmem:[%s1 + $0x18] sm:$0xff]
  %v20 = vld [vmem:[%s2] sm:$0x1]
  %v22 = vlaneseq
  %v23 = vshrl.u32 %v22, 7
  %v24 = vsub.s32 0, %v23
  %v25 = vrot.slane %v20, %v24
  %vm27 = vcmask 261120
  %v29 = vsel %vm27, %v14, 0
  %v32 = vsel %vm27, %v15, 0
  %34 = vmatprep.subr.mxu0 0.0
  %35 = vmatpush1.msra.mxu0 %v16
  %36 = vmatprep.subr.mxu0 0.0
  %37 = vmatpush1.msra.mxu0 %v17
  %38 = vmatprep.subr.mxu0 0.0
  %39 = vmatpush1.msra.mxu0 %v18
  %40 = vmatprep.subr.mxu0 0.0
  %41 = vmatpush1.msra.mxu0 %v19
  %42 = vmatprep.subr.mxu0 0.0
  %43 = vmatpush1.msra.mxu0 0.0
  %44 = vmatprep.subr.mxu0 0.0
  %45 = vmatpush1.msra.mxu0 0.0
  %46 = vmatprep.subr.mxu0 0.0
  %47 = vmatpush1.msra.mxu0 0.0
  %48 = vmatprep.subr.mxu0 0.0
  %49 = vmatpush1.msra.mxu0 0.0
  %50 = vmatprep.subr.mxu0 0.0
  %51 = vmatpush1.msra.mxu0 0.0
  %52 = vmatprep.subr.mxu0 0.0
  %53 = vmatpush1.msra.mxu0 0.0
  %54 = vmatprep.subr.mxu0 0.0
  %55 = vmatpush1.msra.mxu0 0.0
  %56 = vmatprep.subr.mxu0 0.0
  %57 = vmatpush1.msra.mxu0 0.0
  %58 = vmatprep.subr.mxu0 0.0
  %59 = vmatpush1.msra.mxu0 0.0
  %60 = vmatprep.subr.mxu0 0.0
  %61 = vmatpush1.msra.mxu0 0.0
  %62 = vmatprep.subr.mxu0 0.0
  %63 = vmatpush1.msra.mxu0 0.0
  %64 = vmatprep.subr.mxu0 0.0
  %65 = vmatpush1.msra.mxu0 0.0
  %66 = vmatprep.subr.mxu0 0.0
  %67 = vmatpush1.msra.mxu0 0.0
  %68 = vmatprep.subr.mxu0 0.0
  %69 = vmatpush1.msra.mxu0 0.0
  %70 = vmatprep.subr.mxu0 0.0
  %71 = vmatpush1.msra.mxu0 0.0
  %72 = vmatprep.subr.mxu0 0.0
  %73 = vmatpush1.msra.mxu0 0.0
  %74 = vmatprep.subr.mxu0 0.0
  %75 = vmatpush1.msra.mxu0 0.0
  %76 = vmatprep.subr.mxu0 0.0
  %77 = vmatpush1.msra.mxu0 0.0
  %78 = vmatprep.subr.mxu0 0.0
  %79 = vmatpush1.msra.mxu0 0.0
  %80 = vmatprep.subr.mxu0 0.0
  %81 = vmatpush1.msra.mxu0 0.0
  %82 = vmatprep.subr.mxu0 0.0
  %83 = vmatpush1.msra.mxu0 0.0
  %84 = vmatprep.subr.mxu0 0.0
  %85 = vmatpush1.msra.mxu0 0.0
  %86 = vmatprep.subr.mxu0 0.0
  %87 = vmatpush1.msra.mxu0 0.0
  %88 = vmatprep.subr.mxu0 0.0
  %89 = vmatpush1.msra.mxu0 0.0
  %90 = vmatprep.subr.mxu0 0.0
  %91 = vmatpush1.msra.mxu0 0.0
  %92 = vmatprep.subr.mxu0 0.0
  %93 = vmatpush1.msra.mxu0 0.0
  %94 = vmatprep.subr.mxu0 0.0
  %95 = vmatpush1.msra.mxu0 0.0
  %96 = vmatprep.subr.mxu0 0.0
  %97 = vmatpush1.msra.mxu0 0.0
  %98 = vmatprep.mubr.f32.mxu0 0.0
  %99 = vmatmul.mubr.f32.gmra.mrb[0].mxu0 %v29
  %v100 = vpop.f32.mrb[0].mxu0
  %v101 = vadd.f32 %v25, %v100
  %v102 = vpop.f32.mrb[0].mxu0
  %103 = vmatprep.mubr.f32.mxu0 0.0
  %104 = vmatmul.mubr.f32.gmra.mrb[0].mxu0 %v32
  %v105 = vpop.f32.mrb[0].mxu0
  %v106 = vadd.f32 %v25, %v105
  %v107 = vpop.f32.mrb[0].mxu0
  %108 = vdwg.mxu0
  %vm109 = vcmask 48128
  %110 = vst.msk [vmem:[%s3] sm:$0xff] %vm109, %v101
  %111 = vst.msk [vmem:[%s3 + $0x8] sm:$0xff] %vm109, %v106
  // Predicated region
  $region14: #{tpu_custom_call.1} parent=0 // pred_check
    _
  $region15: #{tpu_custom_call.1} parent=0 // pred_check_branch
    %113 = sbr.rel (0) target = $region17
  $region16: #{tpu_custom_call.1} parent=0 // pred_region
    _
  $region17: #{tpu_custom_call.1} parent=0 // pred_fallthru
    _
  // Predicated region
  $region18: #{tpu_custom_call.1} parent=0 // pred_check
    _
  $region19: #{tpu_custom_call.1} parent=0 // pred_check_branch
    %115 = sbr.rel (0) target = $region21
  $region20: #{tpu_custom_call.1} parent=0 // pred_region
    _
  $region21: #{tpu_custom_call.1} parent=0 // pred_fallthru
    _

</llo_original>
